<compile_context>
chip_gen: v6e
topology: v6e:2x2x1
jax: 0.10.0
libtpu: 0.0.40
codegen_flags: <defaults>
</compile_context>

<pallas_src>
import functools

import jax
import jax.numpy as jnp
from jax.experimental import pallas as pl
from jax.experimental.pallas import tpu as pltpu


def _conv_kernel(x_ref, w_ref, b_ref, o_ref, *, KH, pad, Ho):
    # x_ref: (Bg, H, W*Cin)        channel-packed, unpadded input slab
    # w_ref: (KH*W*Cin, Wo*Cout)   banded weight (W padding folded in)
    # b_ref: (1, Wo*Cout)          bias tiled across Wo
    # o_ref: (Bg*Ho, Wo*Cout)      lane-dense output slab
    x = x_ref[...]
    Bg, H, WCin = x.shape

    # Zero-pad in H only (W padding lives in the banded weight).
    if pad > 0:
        zrows = jnp.zeros((Bg, pad, WCin), x.dtype)
        x = jnp.concatenate([zrows, x, zrows], axis=1)       # (Bg, H+2p, WCin)

    # kh-shifted slabs concatenated along lanes -> a single K = KH*W*Cin
    # contraction: one MXU matmul instead of KH*KW tiny K=Cin matmuls.
    lhs = jnp.concatenate([x[:, kh:kh + Ho, :] for kh in range(KH)], axis=-1)
    lhs = lhs.reshape(Bg * Ho, KH * WCin)                    # (Bg*Ho, K)

    acc = jnp.dot(lhs, w_ref[...], preferred_element_type=jnp.float32)
    o_ref[...] = (acc + b_ref[...]).astype(o_ref.dtype)      # single bias add


def _banded_weight(weight, W, pad):
    """(Cout,Cin,KH,KW) OIHW -> (KH*W*Cin, Wo*Cout) banded matmul weight.

    rhs[(kh, w, ci), (wo, co)] = weight[co, ci, kh, w - wo + pad] when the
    tap index is inside [0, KW), else 0 (== zero padding along W).
    """
    Cout, Cin, KH, KW = weight.shape
    Wo = W + 2 * pad - KW + 1
    kh = jnp.arange(KH).reshape(KH, 1, 1, 1, 1)
    wu = jnp.arange(W).reshape(1, W, 1, 1, 1)
    ci = jnp.arange(Cin).reshape(1, 1, Cin, 1, 1)
    wo = jnp.arange(Wo).reshape(1, 1, 1, Wo, 1)
    co = jnp.arange(Cout).reshape(1, 1, 1, 1, Cout)
    kw = wu - wo + pad
    valid = (kw >= 0) & (kw < KW)
    vals = weight[co, ci, kh, jnp.clip(kw, 0, KW - 1)]       # (KH,W,Cin,Wo,Cout)
    vals = jnp.where(valid, vals, jnp.zeros((), weight.dtype))
    return vals.reshape(KH * W * Cin, Wo * Cout)


def conv2d_stacked(x, weight, bias, *, padding=1):
    """x: (T, N, Cin, H, W); weight: (Cout, Cin, KH, KW); bias: (Cout,).

    Equivalent to applying nn.Conv2d(..., padding=padding) with the default
    stride=1, dilation=1, groups=1 to each x[t] and stacking the results.
    """
    T, N, Cin, H, W = x.shape
    Cout, Cin_w, KH, KW = weight.shape
    assert Cin_w == Cin, "groups != 1 not supported"
    # TODO(synk): only stride=1, dilation=1, groups=1 (nn.Conv2d defaults) are implemented.
    B = T * N
    Ho = H + 2 * padding - KH + 1
    Wo = W + 2 * padding - KW + 1

    # Layout plumbing only (no jnp.pad HBM pass):
    #   NCHW -> channel-packed rows (B, H, W*Cin); weights -> banded 2-D.
    x_packed = jnp.transpose(x.reshape(B, Cin, H, W), (0, 2, 3, 1)).reshape(B, H, W * Cin)
    rhs = _banded_weight(weight, W, padding)                 # (KH*W*Cin, Wo*Cout)
    brow = jnp.tile(bias, Wo).reshape(1, Wo * Cout)          # (1, Wo*Cout)

    # Two parallel grid blocks so both TCs on a v7x chip get work.
    G = 2 if (B % 2 == 0 and B >= 2) else 1
    Bg = B // G
    K = KH * W * Cin
    Ncol = Wo * Cout

    kernel = functools.partial(_conv_kernel, KH=KH, pad=padding, Ho=Ho)
    out2d = pl.pallas_call(
        kernel,
        out_shape=jax.ShapeDtypeStruct((B * Ho, Ncol), x.dtype),
        grid=(G,),
        in_specs=[
            pl.BlockSpec((Bg, H, W * Cin), lambda i: (i, 0, 0)),
            pl.BlockSpec((K, Ncol), lambda i: (0, 0)),
            pl.BlockSpec((1, Ncol), lambda i: (0, 0)),
        ],
        out_specs=pl.BlockSpec((Bg * Ho, Ncol), lambda i: (i, 0)),
        compiler_params=pltpu.CompilerParams(dimension_semantics=("parallel",)),
    )(x_packed, rhs, brow)

    # Back to PyTorch layout: (B*Ho, Wo*Cout) -> (T, N, Cout, Ho, Wo).
    out = out2d.reshape(B, Ho, Wo, Cout)
    out = jnp.transpose(out, (0, 3, 1, 2))
    return out.reshape(T, N, Cout, Ho, Wo)


if __name__ == "__main__":
    # Conv2d layer instantiated as nn.Conv2d(4, 8, kernel_size=3, padding=1).
    T, N, Cin, H, W = 2, 2, 4, 16, 16
    Cout, KH, KW, PAD = 8, 3, 3, 1

    key = jax.random.PRNGKey(0)
    kx, kw, kb = jax.random.split(key, 3)
    x = jax.random.normal(kx, (T, N, Cin, H, W), dtype=jnp.float32)
    # Deterministic init mimicking PyTorch's uniform(-k, k), k = 1/sqrt(Cin*KH*KW)
    bound = 1.0 / (Cin * KH * KW) ** 0.5
    weight = jax.random.uniform(kw, (Cout, Cin, KH, KW), jnp.float32, -bound, bound)
    bias = jax.random.uniform(kb, (Cout,), jnp.float32, -bound, bound)

    out = conv2d_stacked(x, weight, bias, padding=PAD)
    out = jax.block_until_ready(out)
    assert out.shape == (T, N, Cout, H, W), out.shape

    # Reference: XLA conv (same semantics as nn.Conv2d applied per step).
    ref = jax.lax.conv_general_dilated(
        x.reshape(T * N, Cin, H, W), weight,
        window_strides=(1, 1), padding=[(PAD, PAD), (PAD, PAD)],
        dimension_numbers=("NCHW", "OIHW", "NCHW"),
    ) + bias.reshape(1, Cout, 1, 1)
    ref = ref.reshape(T, N, Cout, H, W)
    assert jnp.allclose(out, ref, atol=1e-5, rtol=1e-5), float(jnp.max(jnp.abs(out - ref)))

    print("KERNEL_OK")
</pallas_src>

<mosaic_0001>
module attributes {stable_mosaic.version = 11 : i64} {
  func.func @_conv_kernel(%arg0: i32, %arg1: memref<2x16x64xf32, #tpu.memory_space<vmem>>, %arg2: memref<192x128xf32, #tpu.memory_space<vmem>>, %arg3: memref<1x128xf32, #tpu.memory_space<vmem>>, %arg4: memref<32x128xf32, #tpu.memory_space<vmem>>) attributes {dimension_semantics = [#tpu.dimension_semantics<parallel>], iteration_bounds = array<i64: 2>, scalar_prefetch = 0 : i64, scratch_operands = 0 : i64, tpu.core_type = #tpu.core_type<tc>, window_params = [{transform_indices = @transform_0, window_bounds = array<i64: 2, 16, 64>}, {pipeline_mode = #tpu.pipeline_mode<synchronous>, transform_indices = @transform_1, window_bounds = array<i64: 192, 128>}, {pipeline_mode = #tpu.pipeline_mode<synchronous>, transform_indices = @transform_2, window_bounds = array<i64: 1, 128>}, {transform_indices = @transform_3, window_bounds = array<i64: 32, 128>}]} {
    %c0 = arith.constant 0 : index
    %c0_0 = arith.constant 0 : index
    %c0_1 = arith.constant 0 : index
    %0 = vector.load %arg1[%c0, %c0_0, %c0_1] : memref<2x16x64xf32, #tpu.memory_space<vmem>>, vector<2x16x64xf32>
    %cst = arith.constant 0.000000e+00 : f32
    %1 = vector.broadcast %cst : f32 to vector<2x1x64xf32>
    %2 = tpu.concatenate %1, %0, %1 in 1 : vector<2x1x64xf32>, vector<2x16x64xf32>, vector<2x1x64xf32> -> vector<2x18x64xf32>
    %3 = vector.extract_strided_slice %2 {offsets = [0, 0, 0], sizes = [2, 16, 64], strides = [1, 1, 1]} : vector<2x18x64xf32> to vector<2x16x64xf32>
    %4 = vector.extract_strided_slice %2 {offsets = [0, 1, 0], sizes = [2, 16, 64], strides = [1, 1, 1]} : vector<2x18x64xf32> to vector<2x16x64xf32>
    %5 = vector.extract_strided_slice %2 {offsets = [0, 2, 0], sizes = [2, 16, 64], strides = [1, 1, 1]} : vector<2x18x64xf32> to vector<2x16x64xf32>
    %6 = tpu.concatenate %3, %4, %5 in 2 : vector<2x16x64xf32>, vector<2x16x64xf32>, vector<2x16x64xf32> -> vector<2x16x192xf32>
    %7 = vector.shape_cast %6 : vector<2x16x192xf32> to vector<32x192xf32>
    %c0_2 = arith.constant 0 : index
    %c0_3 = arith.constant 0 : index
    %8 = vector.load %arg2[%c0_2, %c0_3] : memref<192x128xf32, #tpu.memory_space<vmem>>, vector<192x128xf32>
    %cst_4 = arith.constant dense<0.000000e+00> : vector<32x128xf32>
    %9 = tpu.matmul %7, %8, %cst_4 {dimension_numbers = #tpu.dot_dimension_numbers<[1], [0], [0], [1], [0, 0, 1, 1], [], []>} : vector<32x192xf32>, vector<192x128xf32>, vector<32x128xf32> -> vector<32x128xf32>
    %c0_5 = arith.constant 0 : index
    %c0_6 = arith.constant 0 : index
    %10 = vector.load %arg3[%c0_5, %c0_6] : memref<1x128xf32, #tpu.memory_space<vmem>>, vector<1x128xf32>
    %11 = vector.broadcast %10 : vector<1x128xf32> to vector<32x128xf32>
    %12 = arith.addf %9, %11 : vector<32x128xf32>
    %c0_7 = arith.constant 0 : index
    %c0_8 = arith.constant 0 : index
    %13 = vector.load %arg4[%c0_7, %c0_8] : memref<32x128xf32, #tpu.memory_space<vmem>>, vector<32x128xf32>
    tpu.vector_store %arg4[%c0_7, %c0_8], %12 {strides = array<i32>} : memref<32x128xf32, #tpu.memory_space<vmem>>, vector<32x128xf32>,
    return
  }
  func.func @transform_0(%arg0: i32) -> (i32, i32, i32) {
    %c0_i32 = arith.constant 0 : i32
    %c0_i32_0 = arith.constant 0 : i32
    %c0_i32_1 = arith.constant 0 : i32
    return %arg0, %c0_i32, %c0_i32_0 : i32, i32, i32
  }
  func.func @transform_1(%arg0: i32) -> (i32, i32) {
    %c0_i32 = arith.constant 0 : i32
    %c0_i32_0 = arith.constant 0 : i32
    %c0_i32_1 = arith.constant 0 : i32
    return %c0_i32, %c0_i32_0 : i32, i32
  }
  func.func @transform_2(%arg0: i32) -> (i32, i32) {
    %c0_i32 = arith.constant 0 : i32
    %c0_i32_0 = arith.constant 0 : i32
    %c0_i32_1 = arith.constant 0 : i32
    return %c0_i32, %c0_i32_0 : i32, i32
  }
  func.func @transform_3(%arg0: i32) -> (i32, i32) {
    %c0_i32 = arith.constant 0 : i32
    %c0_i32_0 = arith.constant 0 : i32
    return %arg0, %c0_i32 : i32, i32
  }
}

</mosaic_0001>

<llo_original>
// kernel: tpu_custom_call.1
$region0: #{tpu_custom_call.1}
  #allocation0 [shape = 'u32[]', space=smem, size = 0x4, offset = 0x4, fixed_abs, tag = 'smem constant byte address 0x4 - core index']
  #allocation1 [shape = 'u32[144,128]{1,0:T(1,128)}', space=vmem, size = 0x12000, scoped, tag = 'internal scratch']
  %s0 = inlined_call_operand.hbm [shape: f32[4,16,64], index: 0, kind: input, shape index: {}]
  %s1 = inlined_call_operand.hbm [shape: f32[192,128], index: 1, kind: input, shape index: {}]
  %s2 = inlined_call_operand.vmem [shape: f32[1,128], index: 2, kind: input, shape index: {}]
  %s3 = inlined_call_operand.hbm [shape: f32[64,128], index: 3, kind: output, shape index: {}]
  %s4 = sld [smem:[#allocation0]]
  $region53: #{tpu_custom_call.1} parent=0
    _
  %s6 = ssub.s32 1, %s4
  %s7 = scalar_select 0, %s6, %s4
  $region1: #{tpu_custom_call.1} parent=0
    #allocation2 [shape = 'u8[32768]{0}', space=vmem, size = 0x8000, scoped, tag = 'input window, operand 0']
    #allocation3 [shape = 's32[2]{0}', space=sflag, size = 0x8, scoped, tag = 'scoped memory for tpu_custom_call.1']
    #allocation4 [shape = 's32[2]{0}', space=sflag, size = 0x8, scoped, tag = 'scoped memory for tpu_custom_call.1']
    #allocation5 [shape = 'u8[98304]{0}', space=vmem, size = 0x18000, scoped, tag = 'input window, operand 1, single buffered']
    #allocation6 [shape = 's32[1]{0}', space=sflag, size = 0x4, scoped, tag = 'scoped memory for tpu_custom_call.1']
    #allocation7 [shape = 'u8[32768]{0}', space=vmem, size = 0x8000, scoped, tag = 'output window, operand 0']
    %8 = vsyncpa [#allocation3], 0
    %s9 = scalar_lea.sflag [#allocation3], 1
    %10 = vsyncpa %s9, 0
    %11 = vsyncpa [#allocation6], 0
    %12 = vsyncpa [#allocation4], 0
    %s13 = scalar_lea.sflag [#allocation4], 1
    %14 = vsyncpa %s13, 0
    loop: start=0, step=1, limit=4
    $region2: #{tpu_custom_call.1} parent=1 // loop_pre_header
      _
    $region3: #{tpu_custom_call.1} parent=1 // loop_header
      %s16 = sphi 0, %s20
      %p17 = scmp.ge.s32.totalorder %s16, 4
      %s26 = sphi 0, %s28
      %s29 = sphi 0, %s26
      %s30 = sphi 0, %s29
      %s46 = sphi 0, %s30
      %s50 = sphi 0, %s50
      %s52 = sphi 0, %s50
      %s53 = sphi 0, %s52
      %s67 = sphi 0, %s53
      %s71 = sphi 0, %s71
      %s73 = sphi 0, %s71
      %s74 = sphi 0, %s73
      %s88 = sphi 0, %s74
      %s94 = sphi 0, %s96
      %s97 = sphi 0, %s94
      %s98 = sphi 0, %s97
      %s114 = sphi 0, %s98
    $region4: #{tpu_custom_call.1} parent=1 // loop_header_branch
      %19 = sbr.rel (%p17) target = $region8
    $region5: #{tpu_custom_call.1} parent=1 // loop_body
      %s21 = ssub.s32 %s16, 1
      %s22 = ssub.s32 %s16, 2
      %s23 = sadd.s32 %s16, 1
      %s24 = ssub.s32 %s16, %s23
      %p25 = scmp.eq.s32.totalorder %s24, 0
      %s27 = sadd.s32 %s26, 1
      %s28 = scalar_select %p25, %s26, %s27
      %p31 = pneg %p25
      %p32 = scmp.eq.s32.totalorder %s16, 1
      %p33 = por %p31, %p32
      %p34 = scmp.ne.s32.totalorder %s26, %s29
      %p35 = scmp.eq.s32.totalorder %s16, 0
      %p36 = por %p34, %p35
      %p37 = scmp.ne.s32.totalorder %s26, %s29
      %p38 = scmp.eq.s32.totalorder %s21, 1
      %p39 = por %p37, %p38
      %p40 = scmp.ne.s32.totalorder %s29, %s30
      %p41 = scmp.eq.s32.totalorder %s21, 0
      %p42 = por %p40, %p41
      %p43 = scmp.ne.s32.totalorder %s29, %s30
      %p44 = scmp.eq.s32.totalorder %s22, 1
      %p45 = por %p43, %p44
      %p47 = scmp.ne.s32.totalorder %s30, %s46
      %p48 = scmp.eq.s32.totalorder %s22, 0
      %p49 = por %p47, %p48
      %s51 = sadd.s32 %s50, 1
      %p54 = scmp.eq.s32.totalorder %s16, 1
      %p55 = scmp.ne.s32.totalorder %s50, %s52
      %p56 = scmp.eq.s32.totalorder %s16, 0
      %p57 = por %p55, %p56
      %p58 = scmp.ne.s32.totalorder %s50, %s52
      %p59 = scmp.eq.s32.totalorder %s21, 1
      %p60 = por %p58, %p59
      %p61 = scmp.ne.s32.totalorder %s52, %s53
      %p62 = scmp.eq.s32.totalorder %s21, 0
      %p63 = por %p61, %p62
      %p64 = scmp.ne.s32.totalorder %s52, %s53
      %p65 = scmp.eq.s32.totalorder %s22, 1
      %p66 = por %p64, %p65
      %p68 = scmp.ne.s32.totalorder %s53, %s67
      %p69 = scmp.eq.s32.totalorder %s22, 0
      %p70 = por %p68, %p69
      %s72 = sadd.s32 %s71, 1
      %p75 = scmp.eq.s32.totalorder %s16, 1
      %p76 = scmp.ne.s32.totalorder %s71, %s73
      %p77 = scmp.eq.s32.totalorder %s16, 0
      %p78 = por %p76, %p77
      %p79 = scmp.ne.s32.totalorder %s71, %s73
      %p80 = scmp.eq.s32.totalorder %s21, 1
      %p81 = por %p79, %p80
      %p82 = scmp.ne.s32.totalorder %s73, %s74
      %p83 = scmp.eq.s32.totalorder %s21, 0
      %p84 = por %p82, %p83
      %p85 = scmp.ne.s32.totalorder %s73, %s74
      %p86 = scmp.eq.s32.totalorder %s22, 1
      %p87 = por %p85, %p86
      %p89 = scmp.ne.s32.totalorder %s74, %s88
      %p90 = scmp.eq.s32.totalorder %s22, 0
      %p91 = por %p89, %p90
      %s92 = ssub.s32 %s16, %s23
      %p93 = scmp.eq.s32.totalorder %s92, 0
      %s95 = sadd.s32 %s94, 1
      %s96 = scalar_select %p93, %s94, %s95
      %p99 = pneg %p93
      %p100 = scmp.eq.s32.totalorder %s16, 1
      %p101 = por %p99, %p100
      %p102 = scmp.ne.s32.totalorder %s94, %s97
      %p103 = scmp.eq.s32.totalorder %s16, 0
      %p104 = por %p102, %p103
      %p105 = scmp.ne.s32.totalorder %s94, %s97
      %p106 = scmp.eq.s32.totalorder %s21, 1
      %p107 = por %p105, %p106
      %p108 = scmp.ne.s32.totalorder %s97, %s98
      %p109 = scmp.eq.s32.totalorder %s21, 0
      %p110 = por %p108, %p109
      %p111 = scmp.ne.s32.totalorder %s97, %s98
      %p112 = scmp.eq.s32.totalorder %s22, 1
      %p113 = por %p111, %p112
      %p115 = scmp.ne.s32.totalorder %s98, %s114
      %p116 = scmp.eq.s32.totalorder %s22, 0
      %p117 = por %p115, %p116
      %p118 = scmp.le.s32.totalorder 1, %s16
      %p119 = scmp.lt.s32.totalorder %s16, 3
      %p120 = pnand %p118, %p119
      %p121 = pneg %p120
      // Predicated region
      $region9: #{tpu_custom_call.1} parent=5 // pred_check
        _
      $region10: #{tpu_custom_call.1} parent=5 // pred_check_branch
        %123 = sbr.rel (%p120) target = $region12
      $region11: #{tpu_custom_call.1} parent=5 // pred_region
        %s124 = ssub.s32 %s16, 1
        // Predicated region
        $region13: #{tpu_custom_call.1} parent=11 // pred_check
          %p125 = pneg %p63
        $region14: #{tpu_custom_call.1} parent=11 // pred_check_branch
          %127 = sbr.rel (%p125) target = $region16
        $region15: #{tpu_custom_call.1} parent=11 // pred_region
          %s129 = ssub.s32 3072, 3072
          %130 = vsyncadd [#allocation6], %s129
          %s131 = sshll.u32 [#allocation5], 4
          %s132 = int_to_ptr.vmem [resolvable:$true] %s131
          %137 = dma.hbm_to_vmem [thread:$0]  %s1, 3072, %s132, [#allocation6], 128, 128, 8
        $region16: #{tpu_custom_call.1} parent=11 // pred_fallthru
          _
        // Predicated region
        $region17: #{tpu_custom_call.1} parent=11 // pred_check
          %p138 = pneg %p84
        $region18: #{tpu_custom_call.1} parent=11 // pred_check_branch
          %140 = sbr.rel (%p138) target = $region20
        $region19: #{tpu_custom_call.1} parent=11 // pred_region
          _
        $region20: #{tpu_custom_call.1} parent=11 // pred_fallthru
          _
      $region12: #{tpu_custom_call.1} parent=5 // pred_fallthru
        _
      %p141 = scmp.lt.s32.totalorder %s16, 2
      // Predicated region
      $region21: #{tpu_custom_call.1} parent=5 // pred_check
        %p142 = pneg %p141
      $region22: #{tpu_custom_call.1} parent=5 // pred_check_branch
        %144 = sbr.rel (%p142) target = $region24
      $region23: #{tpu_custom_call.1} parent=5 // pred_region
        // Predicated region
        $region25: #{tpu_custom_call.1} parent=23 // pred_check
          %p145 = pneg %p36
        $region26: #{tpu_custom_call.1} parent=23 // pred_check_branch
          %147 = sbr.rel (%p145) target = $region28
        $region27: #{tpu_custom_call.1} parent=23 // pred_region
          %s148 = sand.u32 %s26, 1
          %s149 = scalar_lea.sflag [#allocation3], %s148
          %s150 = sand.u32 %s26, 1
          %s151 = smul.addr %s150, 32
          %s152 = scalar_lea.vmem [#allocation2], %s151
          %s153 = smul.u32 2, %s16
          %s155 = ssub.s32 512, 512
          %156 = vsyncadd %s149, %s155
          %s157 = smul.addr %s153, 2
          %s158 = smul.addr %s157, 128
          %s159 = scalar_lea.hbm %s0, %s158
          %s160 = sshll.u32 %s152, 4
          %s161 = int_to_ptr.vmem [resolvable:$true] %s160
          %166 = dma.hbm_to_vmem [thread:$0]  %s159, 512, %s161, %s149, 128, 128, 8
        $region28: #{tpu_custom_call.1} parent=23 // pred_fallthru
          _
      $region24: #{tpu_custom_call.1} parent=5 // pred_fallthru
        _
      %p167 = scmp.le.s32.totalorder 1, %s16
      %p168 = scmp.lt.s32.totalorder %s16, 3
      %p169 = pnand %p167, %p168
      %p170 = pneg %p169
      // Predicated region
      $region29: #{tpu_custom_call.1} parent=5 // pred_check
        _
      $region30: #{tpu_custom_call.1} parent=5 // pred_check_branch
        %172 = sbr.rel (%p169) target = $region32
      $region31: #{tpu_custom_call.1} parent=5 // pred_region
        %s173 = ssub.s32 %s16, 1
        %s174 = sand.u32 %s29, 1
        %s175 = scalar_lea.sflag [#allocation3], %s174
        %s176 = sand.u32 %s29, 1
        %s177 = smul.addr %s176, 32
        %s178 = scalar_lea.vmem [#allocation2], %s177
        // Predicated region
        $region33: #{tpu_custom_call.1} parent=31 // pred_check
          %p179 = pneg %p42
        $region34: #{tpu_custom_call.1} parent=31 // pred_check_branch
          %181 = sbr.rel (%p179) target = $region36
        $region35: #{tpu_custom_call.1} parent=31 // pred_region
          %182 = dma.done %s175, 512
        $region36: #{tpu_custom_call.1} parent=31 // pred_fallthru
          _
        // Predicated region
        $region37: #{tpu_custom_call.1} parent=31 // pred_check
          %p183 = pneg %p63
        $region38: #{tpu_custom_call.1} parent=31 // pred_check_branch
          %185 = sbr.rel (%p183) target = $region40
        $region39: #{tpu_custom_call.1} parent=31 // pred_region
          %186 = dma.done [#allocation6], 3072
        $region40: #{tpu_custom_call.1} parent=31 // pred_fallthru
          _
        %s187 = sand.u32 %s29, 1
        %s188 = scalar_lea.sflag [#allocation3], %s187
        %s189 = sand.u32 %s29, 1
        %s190 = smul.addr %s189, 32
        %s191 = scalar_lea.vmem [#allocation2], %s190
        %p192 = pneg %p42
        %p193 = pneg %p39
        %p194 = pneg %p63
        %p195 = pneg %p60
        %p196 = pneg %p84
        %p197 = pneg %p81
        %p198 = pneg %p110
        %p199 = pneg %p107
        %s200 = sand.u32 %s97, 1
        %s201 = scalar_lea.sflag [#allocation4], %s200
        %s202 = sand.u32 %s97, 1
        %s203 = smul.addr %s202, 32
        %s204 = scalar_lea.vmem [#allocation7], %s203
        %s205 = smul.u32 2, %s21
        %s206 = smul.u32 4, %s21
        %v207 = vld [vmem:[%s178] sm:$0xff]
        %v208 = vld [vmem:[%s178 + $0x8] sm:$0xff]
        %v209 = vld [vmem:[%s178 + $0x10] sm:$0xff]
        %v210 = vld [vmem:[%s178 + $0x18] sm:$0xff]
        %vm215 = vcmask 1040384
        %v216 = vrot.slane %v207, 7
        %v217 = vrot.slane %v208, 7
        %v218 = vsel %vm215, %v216, %v217
        %v219 = vrot.slane %v209, 7
        %v220 = vrot.slane %v210, 7
        %v221 = vsel %vm215, %v219, %v220
        %v228 = vsel %vm215, 0.0, %v216
        %v229 = vsel %vm215, 0.0, %v219
        %v230 = vsel %vm215, %v217, 0.0
        %v231 = vsel %vm215, %v220, 0.0
        %vm236 = vcmask 1046528
        %v237 = vrot.slane %v228, 1
        %v238 = vrot.slane %v218, 1
        %v239 = vsel %vm236, %v237, %v238
        %v240 = vrot.slane %v230, 1
        %v241 = vsel %vm236, %v238, %v240
        %v242 = vrot.slane %v229, 1
        %v243 = vrot.slane %v221, 1
        %v244 = vsel %vm236, %v242, %v243
        %v245 = vrot.slane %v231, 1
        %v246 = vsel %vm236, %v243, %v245
        %247 = vrot.lane.b32.xlu0 %v239, 64
        %v248 = vpop.permute.xlu0 %247
        %249 = vrot.lane.b32.xlu0 %v241, 64
        %v250 = vpop.permute.xlu0 %249
        %251 = vrot.lane.b32.xlu0 %v244, 64
        %v252 = vpop.permute.xlu0 %251
        %253 = vrot.lane.b32.xlu0 %v246, 64
        %v254 = vpop.permute.xlu0 %253
        %vm259 = vcmask 1045504
        %v260 = vrot.slane %v228, 2
        %v261 = vrot.slane %v218, 2
        %v262 = vsel %vm259, %v260, %v261
        %v263 = vrot.slane %v230, 2
        %v264 = vsel %vm259, %v261, %v263
        %v265 = vrot.slane %v229, 2
        %v266 = vrot.slane %v221, 2
        %v267 = vsel %vm259, %v265, %v266
        %v268 = vrot.slane %v231, 2
        %v269 = vsel %vm259, %v266, %v268
        %vm270 = vcmask 523264
        %v271 = vsel %vm270, %v228, %v248
        %v272 = vsel %vm270, %v218, %v250
        %v273 = vsel %vm270, %v229, %v252
        %v274 = vsel %vm270, %v221, %v254
        %v275 = vld [vmem:[#allocation5] sm:$0xff]
        %v276 = vld [vmem:[#allocation5 + $0x8] sm:$0xff]
        %v277 = vld [vmem:[#allocation5 + $0x10] sm:$0xff]
        %v278 = vld [vmem:[#allocation5 + $0x18] sm:$0xff]
        %v279 = vld [vmem:[#allocation5 + $0x20] sm:$0xff]
        %v280 = vld [vmem:[#allocation5 + $0x28] sm:$0xff]
        %v281 = vld [vmem:[#allocation5 + $0x30] sm:$0xff]
        %v282 = vld [vmem:[#allocation5 + $0x38] sm:$0xff]
        %v283 = vld [vmem:[#allocation5 + $0x40] sm:$0xff]
        %v284 = vld [vmem:[#allocation5 + $0x48] sm:$0xff]
        %v285 = vld [vmem:[#allocation5 + $0x50] sm:$0xff]
        %v286 = vld [vmem:[#allocation5 + $0x58] sm:$0xff]
        %v287 = vld [vmem:[#allocation5 + $0x60] sm:$0xff]
        %v288 = vld [vmem:[#allocation5 + $0x68] sm:$0xff]
        %v289 = vld [vmem:[#allocation5 + $0x70] sm:$0xff]
        %v290 = vld [vmem:[#allocation5 + $0x78] sm:$0xff]
        %v291 = vld [vmem:[#allocation5 + $0x80] sm:$0xff]
        %v292 = vld [vmem:[#allocation5 + $0x88] sm:$0xff]
        %v293 = vld [vmem:[#allocation5 + $0x90] sm:$0xff]
        %v294 = vld [vmem:[#allocation5 + $0x98] sm:$0xff]
        %v295 = vld [vmem:[#allocation5 + $0xa0] sm:$0xff]
        %v296 = vld [vmem:[#allocation5 + $0xa8] sm:$0xff]
        %v297 = vld [vmem:[#allocation5 + $0xb0] sm:$0xff]
        %v298 = vld [vmem:[#allocation5 + $0xb8] sm:$0xff]
        %v299 = vld [vmem:[%s2] sm:$0x1]
        %v301 = vlaneseq
        %v302 = vshrl.u32 %v301, 7
        %v303 = vsub.s32 0, %v302
        %v304 = vrot.slane %v299, %v303
        %v306 = vsel %vm270, %v262, 0
        %v308 = vsel %vm270, %v264, 0
        %v310 = vsel %vm270, %v267, 0
        %v312 = vsel %vm270, %v269, 0
        %314 = vmatprep.subr.mxu0 0.0
        %315 = vmatpush1.msra.mxu0 %v290
        %316 = vmatprep.subr.mxu0 0.0
        %317 = vmatpush1.msra.mxu0 %v289
        %318 = vmatprep.subr.mxu0 0.0
        %319 = vmatpush1.msra.mxu0 %v288
        %320 = vmatprep.subr.mxu0 0.0
        %321 = vmatpush1.msra.mxu0 %v287
        %322 = vmatprep.subr.mxu0 0.0
        %323 = vmatpush1.msra.mxu0 %v286
        %324 = vmatprep.subr.mxu0 0.0
        %325 = vmatpush1.msra.mxu0 %v285
        %326 = vmatprep.subr.mxu0 0.0
        %327 = vmatpush1.msra.mxu0 %v284
        %328 = vmatprep.subr.mxu0 0.0
        %329 = vmatpush1.msra.mxu0 %v283
        %330 = vmatprep.subr.mxu0 0.0
        %331 = vmatpush1.msra.mxu0 %v282
        %332 = vmatprep.subr.mxu0 0.0
        %333 = vmatpush1.msra.mxu0 %v281
        %334 = vmatprep.subr.mxu0 0.0
        %335 = vmatpush1.msra.mxu0 %v280
        %336 = vmatprep.subr.mxu0 0.0
        %337 = vmatpush1.msra.mxu0 %v279
        %338 = vmatprep.subr.mxu0 0.0
        %339 = vmatpush1.msra.mxu0 %v278
        %340 = vmatprep.subr.mxu0 0.0
        %341 = vmatpush1.msra.mxu0 %v277
        %342 = vmatprep.subr.mxu0 0.0
        %343 = vmatpush1.msra.mxu0 %v276
        %344 = vmatprep.subr.mxu0 0.0
        %345 = vmatpush1.msra.mxu0 %v275
        %346 = vmatprep.subr.mxu0 0.0
        %347 = vmatpush2.msra.mxu0 0.0
        %348 = vmatprep.subr.mxu0 0.0
        %349 = vmatpush2.msra.mxu0 0.0
        %350 = vmatprep.subr.mxu0 0.0
        %351 = vmatpush2.msra.mxu0 0.0
        %352 = vmatprep.subr.mxu0 0.0
        %353 = vmatpush2.msra.mxu0 0.0
        %354 = vmatprep.subr.mxu0 0.0
        %355 = vmatpush2.msra.mxu0 0.0
        %356 = vmatprep.subr.mxu0 0.0
        %357 = vmatpush2.msra.mxu0 0.0
        %358 = vmatprep.subr.mxu0 0.0
        %359 = vmatpush2.msra.mxu0 0.0
        %360 = vmatprep.subr.mxu0 0.0
        %361 = vmatpush2.msra.mxu0 0.0
        %362 = vmatprep.subr.mxu0 0.0
        %363 = vmatpush2.msra.mxu0 %v298
        %364 = vmatprep.subr.mxu0 0.0
        %365 = vmatpush2.msra.mxu0 %v297
        %366 = vmatprep.subr.mxu0 0.0
        %367 = vmatpush2.msra.mxu0 %v296
        %368 = vmatprep.subr.mxu0 0.0
        %369 = vmatpush2.msra.mxu0 %v295
        %370 = vmatprep.subr.mxu0 0.0
        %371 = vmatpush2.msra.mxu0 %v294
        %372 = vmatprep.subr.mxu0 0.0
        %373 = vmatpush2.msra.mxu0 %v293
        %374 = vmatprep.subr.mxu0 0.0
        %375 = vmatpush2.msra.mxu0 %v292
        %376 = vmatprep.subr.mxu0 0.0
        %377 = vmatpush2.msra.mxu0 %v291
        %378 = vmatprep.mubr.f32.mxu0 %v306
        %379 = vmatmul.mubr.f32.gmra.mxu0 %v271
        %v380 = vpop.f32.mrf.mxu0
        %v381 = vadd.f32 %v304, %v380
        %v382 = vpop.f32.mrf.mxu0
        %383 = vmatprep.mubr.f32.mxu0 %v308
        %384 = vmatmul.mubr.f32.gmra.mxu0 %v272
        %v385 = vpop.f32.mrf.mxu0
        %v386 = vadd.f32 %v304, %v385
        %v387 = vpop.f32.mrf.mxu0
        %388 = vmatprep.mubr.f32.mxu0 %v310
        %389 = vmatmul.mubr.f32.gmra.mxu0 %v273
        %v390 = vpop.f32.mrf.mxu0
        %v391 = vadd.f32 %v304, %v390
        %v392 = vpop.f32.mrf.mxu0
        %393 = vmatprep.mubr.f32.mxu0 %v312
        %394 = vmatmul.mubr.f32.gmra.mxu0 %v274
        %v395 = vpop.f32.mrf.mxu0
        %v396 = vadd.f32 %v304, %v395
        %v397 = vpop.f32.mrf.mxu0
        %398 = vdwg.mxu0
        %399 = vst [vmem:[%s204] sm:$0xff] %v381
        %400 = vst [vmem:[%s204 + $0x8] sm:$0xff] %v386
        %401 = vst [vmem:[%s204 + $0x10] sm:$0xff] %v391
        %402 = vst [vmem:[%s204 + $0x18] sm:$0xff] %v396
        %s403 = sand.u32 %s97, 1
        %s404 = scalar_lea.sflag [#allocation4], %s403
        %s405 = sand.u32 %s97, 1
        %s406 = smul.addr %s405, 32
        %s407 = scalar_lea.vmem [#allocation7], %s406
        // Predicated region
        $region41: #{tpu_custom_call.1} parent=31 // pred_check
          %p408 = pneg %p107
        $region42: #{tpu_custom_call.1} parent=31 // pred_check_branch
          %410 = sbr.rel (%p408) target = $region44
        $region43: #{tpu_custom_call.1} parent=31 // pred_region
          %s411 = smul.u32 4, %s21
          %s413 = ssub.s32 512, 512
          %414 = vsyncadd %s404, %s413
          %s415 = smul.addr %s411, 128
          %s416 = scalar_lea.hbm %s3, %s415
          %s417 = sshll.u32 %s407, 4
          %s418 = int_to_ptr.vmem [resolvable:$true] %s417
          %423 = dma.vmem_to_hbm [thread:$0]  %s418, 512, %s416, %s404, 128, 128, 8
        $region44: #{tpu_custom_call.1} parent=31 // pred_fallthru
          _
      $region32: #{tpu_custom_call.1} parent=5 // pred_fallthru
        _
      %p424 = scmp.le.s32.totalorder 2, %s16
      // Predicated region
      $region45: #{tpu_custom_call.1} parent=5 // pred_check
        %p425 = pneg %p424
      $region46: #{tpu_custom_call.1} parent=5 // pred_check_branch
        %427 = sbr.rel (%p425) target = $region48
      $region47: #{tpu_custom_call.1} parent=5 // pred_region
        %s428 = ssub.s32 %s16, 2
        // Predicated region
        $region49: #{tpu_custom_call.1} parent=47 // pred_check
          %p429 = pneg %p113
        $region50: #{tpu_custom_call.1} parent=47 // pred_check_branch
          %431 = sbr.rel (%p429) target = $region52
        $region51: #{tpu_custom_call.1} parent=47 // pred_region
          %s432 = sand.u32 %s98, 1
          %s433 = scalar_lea.sflag [#allocation4], %s432
          %s434 = sand.u32 %s98, 1
          %s435 = smul.addr %s434, 32
          %s436 = scalar_lea.vmem [#allocation7], %s435
          %437 = dma.done %s433, 512
        $region52: #{tpu_custom_call.1} parent=47 // pred_fallthru
          _
      $region48: #{tpu_custom_call.1} parent=5 // pred_fallthru
        _
    $region6: #{tpu_custom_call.1} parent=1 // loop_footer
      %s20 = sadd.s32 1, %s16
    $region7: #{tpu_custom_call.1} parent=1 // loop_footer_branch
      %15 = sbr.rel target = $region3
    $region8: #{tpu_custom_call.1} parent=1 // loop_exit
      _
    %438 = vsyncpa [#allocation3], 1
    %s439 = scalar_lea.sflag [#allocation3], 1
    %440 = vsyncpa %s439, 1
    %441 = vsyncpa [#allocation6], 1
    %442 = vsyncpa [#allocation4], 1
    %s443 = scalar_lea.sflag [#allocation4], 1
    %444 = vsyncpa %s443, 1

</llo_original>
